<compile_context>
chip_gen: v7x
topology: tpu7x:2x2x1
jax: 0.10.0
libtpu: 0.0.40
codegen_flags: <defaults>
</compile_context>

<pallas_src>
import functools

import jax
import jax.numpy as jnp
from jax.experimental import pallas as pl
from jax.experimental.pallas import tpu as pltpu


def _round_up(x, m):
    return (x + m - 1) // m * m


# ---------------------------------------------------------------------------
# Pallas kernel: explicit in-VMEM im2col per row strip + one K=9C MXU matmul
# ---------------------------------------------------------------------------
def _downsample_conv_kernel(x_ref, w_ref, b_ref, o_ref, col_ref, *,
                            C, OH, OW, TM):
    """One (batch, cout-tile) grid step of the stride-2 3x3 conv.

    x_ref  : (1, OH+1, OW+1, 4C) space-to-depth padded input (VMEM resident);
             channel index = ph*2C + pw*C + c with
             x_s2d[., i, j, ph*2C + pw*C + c] = x_pad[., 2i+ph, 2j+pw, c]
    w_ref  : (9C, tn)            packed per-tap weights (usually grid-resident)
    b_ref  : (1, tn)             bias (f32)
    o_ref  : (1, OH, OW, tn)     NHWC output tile (tn is a multiple of 128)
    col_ref: (TM*OW, 9C)         im2col scratch for one output-row strip
    """
    f32 = jnp.float32
    Ms = TM * OW
    bias = b_ref[...].astype(f32)                      # (1, tn)

    def do_strip(r0):
        # ---- explicit im2col: 5 unit-stride slab copies into col_ref -------
        # tap (dh=0, dw=0): kh,kw in {0,1}   -> all 4C s2d channels
        col_ref[:, 0:4 * C] = (
            x_ref[0, pl.ds(r0, TM), 0:OW, :].reshape(Ms, 4 * C))
        # tap (dh=1, dw=0): kh=2, kw in {0,1} -> ph=0 channels [0:2C)
        col_ref[:, 4 * C:6 * C] = (
            x_ref[0, pl.ds(r0 + 1, TM), 0:OW, 0:2 * C].reshape(Ms, 2 * C))
        # tap (dh=0, dw=1): kh in {0,1}, kw=2 -> pw=0 channels, two C chunks
        col_ref[:, 6 * C:7 * C] = (
            x_ref[0, pl.ds(r0, TM), 1:OW + 1, 0:C].reshape(Ms, C))
        col_ref[:, 7 * C:8 * C] = (
            x_ref[0, pl.ds(r0, TM), 1:OW + 1, 2 * C:3 * C].reshape(Ms, C))
        # tap (dh=1, dw=1): kh=2, kw=2        -> (ph=0, pw=0) = [0:C)
        col_ref[:, 8 * C:9 * C] = (
            x_ref[0, pl.ds(r0 + 1, TM), 1:OW + 1, 0:C].reshape(Ms, C))

        # ---- one long-K MXU matmul, f32 accumulate, bias in f32 ------------
        acc = jnp.dot(col_ref[...], w_ref[...], preferred_element_type=f32)
        out = (acc + bias).astype(o_ref.dtype)         # (Ms, tn)
        o_ref[0, pl.ds(r0, TM), :, :] = out.reshape(TM, OW, out.shape[-1])

    nstrips = -(-OH // TM)                             # static cdiv
    if nstrips <= 4:
        # Static unroll: fully static slice starts -> best codegen.
        for s in range(nstrips):
            do_strip(min(s * TM, OH - TM))             # clamp last (re-writes ok)
    else:
        def body(s, carry):
            do_strip(jnp.minimum(s * TM, OH - TM))
            return carry
        jax.lax.fori_loop(0, nstrips, body, 0)


# ---------------------------------------------------------------------------
# Tiling / VMEM helpers
# ---------------------------------------------------------------------------
def _pick_cout_tile(cout_pad, C, cbpe):
    # Keep the packed weight fully VMEM-resident (nct == 1) whenever its
    # double-buffered block stays within a few MiB; otherwise tile Cout.
    for tn in (cout_pad, 512, 256, 128):
        if tn <= cout_pad and cout_pad % tn == 0 and 2 * 9 * C * tn * cbpe <= 8 * 2 ** 20:
            return tn
    return 128


def _pick_row_strip(OH, OW, C, cbpe, tn):
    # Largest strip with M = TM*OW <= ~1024 rows and bounded in-kernel scratch
    # (im2col + f32 accumulator + output temp).
    best = 1
    col_w = _round_up(9 * C, 128)
    for tm in range(1, OH + 1):
        ms = tm * OW
        scratch = ms * col_w * cbpe + 2 * ms * tn * 4
        if ms <= 1024 and scratch <= 12 * 2 ** 20:
            best = tm
    return best


def _vmem_bytes(shape, bpe):
    # conservative: pad trailing two dims to the (8, 128) tile
    dims = list(shape)
    if len(dims) >= 2:
        dims[-1] = _round_up(dims[-1], 128)
        dims[-2] = _round_up(dims[-2], 8)
    n = 1
    for d in dims:
        n *= d
    return n * bpe


def _vmem_capacity_bytes():
    try:
        return int(pltpu.get_tpu_info().vmem_capacity_bytes)
    except Exception:
        return 64 * 2 ** 20          # conservative fallback (fits all gens)


# ---------------------------------------------------------------------------
# NHWC forward (hot path: no NCHW transposes, lane-dense end to end)
# ---------------------------------------------------------------------------
@functools.partial(jax.jit, static_argnames=("factor", "compute_dtype"))
def downsample_forward_nhwc(x_nhwc, weight_oihw, bias, factor=1,
                            compute_dtype=None):
    """Conv2d(C, C, k=3, stride=2, padding=1) on an NHWC input, NHWC output.

    compute_dtype: MXU operand dtype.  None -> use x.dtype (exact parity for
    f32 inputs).  Pass jnp.bfloat16 on v5e/v6e/v7x for MXU peak (f32 accumulate
    is kept; small divergence from an f32 reference is expected).
    """
    # TODO(synk): generalize the space-to-depth decomposition to stride 2*factor > 2.
    assert factor == 1, "fused kernel implemented for factor=1 (stride=2)"
    N, H, W, C = x_nhwc.shape
    Cout, Cin, KH, KW = weight_oihw.shape
    assert C == Cin and Cout == Cin and KH == 3 and KW == 3
    stride = 2

    OH = (H + 2 - KH) // stride + 1
    OW = (W + 2 - KW) // stride + 1

    out_dtype = x_nhwc.dtype
    cdt = jnp.dtype(compute_dtype) if compute_dtype is not None else jnp.dtype(out_dtype)
    cbpe = cdt.itemsize
    obpe = jnp.dtype(out_dtype).itemsize

    # conv padding=1, plus pad up to even extents for the 2x2 space-to-depth.
    eh = (H + 2) % 2
    ew = (W + 2) % 2
    x_pad = jnp.pad(x_nhwc.astype(cdt), ((0, 0), (1, 1 + eh), (1, 1 + ew), (0, 0)))
    OHp = (H + 2 + eh) // 2            # == OH + 1
    OWp = (W + 2 + ew) // 2            # == OW + 1

    # Space-to-depth(2): one cheap reshuffle, same total bytes as the input.
    # TODO(synk): verify in HLO that pad + reshape + transpose fuse into one pass.
    x_s2d = x_pad.reshape(N, OHp, 2, OWp, 2, C)
    x_s2d = x_s2d.transpose(0, 1, 3, 2, 4, 5).reshape(N, OHp, OWp, 4 * C)

    # Pack weights: OIHW -> HWIO -> per-tap row blocks (9C, Cout); zero-pad
    # Cout to a multiple of 128 so output stores are lane-dense (unmasked vst)
    # and the MXU N dimension is never < 128.
    Cout_pad = max(128, _round_up(Cout, 128))
    w = jnp.transpose(weight_oihw, (2, 3, 1, 0)).astype(cdt)       # (3,3,C,Cout)
    w_packed = jnp.concatenate(
        [
            w[0:2, 0:2].reshape(4 * C, Cout),   # tap (0,0): rows ordered (kh,kw,c)
            w[2, 0:2].reshape(2 * C, Cout),     # tap (1,0): rows ordered (kw,c)
            w[0:2, 2].reshape(2 * C, Cout),     # tap (0,1): rows ordered (kh,c)
            w[2, 2].reshape(C, Cout),           # tap (1,1)
        ],
        axis=0,
    )
    if Cout_pad != Cout:
        w_packed = jnp.pad(w_packed, ((0, 0), (0, Cout_pad - Cout)))
        bias_p = jnp.pad(bias.astype(jnp.float32), (0, Cout_pad - Cout))
    else:
        bias_p = bias.astype(jnp.float32)
    bias2d = bias_p.reshape(1, Cout_pad)

    tn = _pick_cout_tile(Cout_pad, C, cbpe)
    nct = Cout_pad // tn
    TM = _pick_row_strip(OH, OW, C, cbpe, tn)
    Ms = TM * OW

    kernel = functools.partial(_downsample_conv_kernel, C=C, OH=OH, OW=OW, TM=TM)

    # VMEM accounting: double-buffered blocks + im2col scratch + f32 acc/out temps.
    x_blk = _vmem_bytes((OHp, OWp, 4 * C), cbpe)
    w_blk = _vmem_bytes((9 * C, tn), cbpe)
    b_blk = _vmem_bytes((1, tn), 4)
    o_blk = _vmem_bytes((OH, OW, tn), obpe)
    col_blk = _vmem_bytes((Ms, 9 * C), cbpe)
    tmp_blk = 2 * _vmem_bytes((Ms, tn), 4)
    vmem_est = 2 * (x_blk + w_blk + b_blk) + 2 * o_blk + col_blk + tmp_blk + (2 << 20)
    vmem_cap = _vmem_capacity_bytes()
    vmem_limit = int(min(max(vmem_est, 32 * 2 ** 20), int(0.75 * vmem_cap)))

    cost = pl.CostEstimate(
        flops=2 * N * OH * OW * 9 * C * Cout_pad,
        transcendentals=0,
        bytes_accessed=int(
            N * OHp * OWp * 4 * C * cbpe                          # input, once per n
            + (N if nct > 1 else 1) * 9 * C * Cout_pad * cbpe     # weights
            + N * OH * OW * Cout_pad * obpe                       # output
        ),
    )

    # v7x megacore: shard along the batch axis so both cores reuse one resident
    # x image; the cout axis (usually size 1) stays "arbitrary".
    dim_sem = ("parallel", "arbitrary") if N > 1 else ("parallel", "parallel")

    out = pl.pallas_call(
        kernel,
        out_shape=jax.ShapeDtypeStruct((N, OH, OW, Cout_pad), out_dtype),
        grid=(N, nct),
        in_specs=[
            pl.BlockSpec((1, OHp, OWp, 4 * C), lambda n, j: (n, 0, 0, 0)),
            pl.BlockSpec((9 * C, tn), lambda n, j: (0, j)),
            pl.BlockSpec((1, tn), lambda n, j: (0, j)),
        ],
        out_specs=pl.BlockSpec((1, OH, OW, tn), lambda n, j: (n, 0, 0, j)),
        scratch_shapes=[pltpu.VMEM((Ms, 9 * C), cdt)],
        compiler_params=pltpu.CompilerParams(
            dimension_semantics=dim_sem,
            vmem_limit_bytes=vmem_limit,
        ),
        cost_estimate=cost,
    )(x_s2d, w_packed, bias2d)

    if Cout_pad != Cout:
        out = out[..., :Cout]
    return out


# ---------------------------------------------------------------------------
# PyTorch-parity wrapper (NCHW in / NCHW out).  Prefer the NHWC entry point
# when the surrounding network is channels-last (skips both transposes).
# ---------------------------------------------------------------------------
@functools.partial(jax.jit, static_argnames=("factor", "compute_dtype"))
def downsample_forward(x_nchw, weight_oihw, bias, factor=1, compute_dtype=None):
    assert x_nchw.shape[1] == weight_oihw.shape[0]     # mirrors the module's assert
    x_nhwc = jnp.transpose(x_nchw, (0, 2, 3, 1))
    out = downsample_forward_nhwc(x_nhwc, weight_oihw, bias, factor=factor,
                                  compute_dtype=compute_dtype)
    return jnp.transpose(out, (0, 3, 1, 2))


# ---------------------------------------------------------------------------
# Parameter init (deterministic, mirrors nn.Conv2d default uniform bounds)
# ---------------------------------------------------------------------------
def init_downsample_params(key, channels):
    kw, kb = jax.random.split(key)
    fan_in = channels * 3 * 3
    bound = 1.0 / (fan_in ** 0.5)
    weight = jax.random.uniform(
        kw, (channels, channels, 3, 3), jnp.float32, minval=-bound, maxval=bound)
    bias = jax.random.uniform(
        kb, (channels,), jnp.float32, minval=-bound, maxval=bound)
    return weight, bias


if __name__ == "__main__":
    key = jax.random.PRNGKey(0)
    k_x, k_p = jax.random.split(key)

    N, C, H, W = 2, 4, 16, 16          # small NCHW input, channels == self.channels
    x = jax.random.normal(k_x, (N, C, H, W), jnp.float32)
    weight, bias = init_downsample_params(k_p, C)

    # Reference: XLA's native conv (same semantics as the PyTorch op).
    ref = jax.lax.conv_general_dilated(
        x, weight, window_strides=(2, 2), padding=((1, 1), (1, 1)),
        dimension_numbers=("NCHW", "OIHW", "NCHW"),
    ) + bias[None, :, None, None]

    # 1) f32 compute path: parity with the PyTorch module.
    out = jax.block_until_ready(downsample_forward(x, weight, bias, factor=1))
    assert out.shape == (N, C, H // 2, W // 2), out.shape
    assert jnp.allclose(out, ref, atol=1e-3, rtol=1e-3), \
        float(jnp.max(jnp.abs(out - ref)))

    # 2) bf16-operand path (recommended for MXU peak); f32 accumulation kept,
    #    small intentional divergence from the f32 reference.
    out_bf16 = jax.block_until_ready(
        downsample_forward(x, weight, bias, factor=1, compute_dtype=jnp.bfloat16))
    assert out_bf16.shape == (N, C, H // 2, W // 2), out_bf16.shape
    assert jnp.allclose(out_bf16, ref, atol=7.5e-2, rtol=5e-2), \
        float(jnp.max(jnp.abs(out_bf16 - ref)))

    print("KERNEL_OK")
</pallas_src>

<mosaic_0001>
module attributes {stable_mosaic.version = 11 : i64} {
  func.func @_downsample_conv_kernel(%arg0: i32, %arg1: i32, %arg2: memref<1x9x9x16xf32, #tpu.memory_space<vmem>>, %arg3: memref<36x128xf32, #tpu.memory_space<vmem>>, %arg4: memref<1x128xf32, #tpu.memory_space<vmem>>, %arg5: memref<1x8x8x128xf32, #tpu.memory_space<vmem>>, %arg6: memref<64x36xf32, #tpu.memory_space<vmem>>) attributes {dimension_semantics = [#tpu.dimension_semantics<parallel>, #tpu.dimension_semantics<arbitrary>], iteration_bounds = array<i64: 2, 1>, scalar_prefetch = 0 : i64, scratch_operands = 1 : i64, tpu.core_type = #tpu.core_type<tc>, window_params = [{transform_indices = @transform_0, window_bounds = array<i64: 1, 9, 9, 16>}, {transform_indices = @transform_1, window_bounds = array<i64: 36, 128>}, {transform_indices = @transform_2, window_bounds = array<i64: 1, 128>}, {transform_indices = @transform_3, window_bounds = array<i64: 1, 8, 8, 128>}]} {
    %c0 = arith.constant 0 : index
    %c0_0 = arith.constant 0 : index
    %0 = vector.load %arg4[%c0, %c0_0] : memref<1x128xf32, #tpu.memory_space<vmem>>, vector<1x128xf32>
    %c0_1 = arith.constant 0 : index
    %c0_2 = arith.constant 0 : index
    %c0_3 = arith.constant 0 : index
    %c0_4 = arith.constant 0 : index
    %1 = vector.load %arg2[%c0_1, %c0_2, %c0_3, %c0_4] : memref<1x9x9x16xf32, #tpu.memory_space<vmem>>, vector<1x8x8x16xf32>
    %2 = vector.shape_cast %1 : vector<1x8x8x16xf32> to vector<8x8x16xf32>
    %3 = vector.shape_cast %2 : vector<8x8x16xf32> to vector<64x16xf32>
    %c0_5 = arith.constant 0 : index
    %c0_6 = arith.constant 0 : index
    %4 = vector.load %arg6[%c0_5, %c0_6] : memref<64x36xf32, #tpu.memory_space<vmem>>, vector<64x16xf32>
    tpu.vector_store %arg6[%c0_5, %c0_6], %3 {strides = array<i32>} : memref<64x36xf32, #tpu.memory_space<vmem>>, vector<64x16xf32>,
    %c0_7 = arith.constant 0 : index
    %c1 = arith.constant 1 : index
    %c0_8 = arith.constant 0 : index
    %c0_9 = arith.constant 0 : index
    %5 = vector.load %arg2[%c0_7, %c1, %c0_8, %c0_9] : memref<1x9x9x16xf32, #tpu.memory_space<vmem>>, vector<1x8x8x8xf32>
    %6 = vector.shape_cast %5 : vector<1x8x8x8xf32> to vector<8x8x8xf32>
    %7 = vector.shape_cast %6 : vector<8x8x8xf32> to vector<64x8xf32>
    %c0_10 = arith.constant 0 : index
    %c16 = arith.constant 16 : index
    %8 = vector.load %arg6[%c0_10, %c16] : memref<64x36xf32, #tpu.memory_space<vmem>>, vector<64x8xf32>
    tpu.vector_store %arg6[%c0_10, %c16], %7 {strides = array<i32>} : memref<64x36xf32, #tpu.memory_space<vmem>>, vector<64x8xf32>,
    %c0_11 = arith.constant 0 : index
    %c0_12 = arith.constant 0 : index
    %c1_13 = arith.constant 1 : index
    %c0_14 = arith.constant 0 : index
    %9 = vector.load %arg2[%c0_11, %c0_12, %c1_13, %c0_14] : memref<1x9x9x16xf32, #tpu.memory_space<vmem>>, vector<1x8x8x4xf32>
    %10 = vector.shape_cast %9 : vector<1x8x8x4xf32> to vector<8x8x4xf32>
    %11 = vector.shape_cast %10 : vector<8x8x4xf32> to vector<64x4xf32>
    %c0_15 = arith.constant 0 : index
    %c24 = arith.constant 24 : index
    %12 = vector.load %arg6[%c0_15, %c24] : memref<64x36xf32, #tpu.memory_space<vmem>>, vector<64x4xf32>
    tpu.vector_store %arg6[%c0_15, %c24], %11 {strides = array<i32>} : memref<64x36xf32, #tpu.memory_space<vmem>>, vector<64x4xf32>,
    %c0_16 = arith.constant 0 : index
    %c0_17 = arith.constant 0 : index
    %c1_18 = arith.constant 1 : index
    %c8 = arith.constant 8 : index
    %13 = vector.load %arg2[%c0_16, %c0_17, %c1_18, %c8] : memref<1x9x9x16xf32, #tpu.memory_space<vmem>>, vector<1x8x8x4xf32>
    %14 = vector.shape_cast %13 : vector<1x8x8x4xf32> to vector<8x8x4xf32>
    %15 = vector.shape_cast %14 : vector<8x8x4xf32> to vector<64x4xf32>
    %c0_19 = arith.constant 0 : index
    %c28 = arith.constant 28 : index
    %16 = vector.load %arg6[%c0_19, %c28] : memref<64x36xf32, #tpu.memory_space<vmem>>, vector<64x4xf32>
    tpu.vector_store %arg6[%c0_19, %c28], %15 {strides = array<i32>} : memref<64x36xf32, #tpu.memory_space<vmem>>, vector<64x4xf32>,
    %c0_20 = arith.constant 0 : index
    %c1_21 = arith.constant 1 : index
    %c1_22 = arith.constant 1 : index
    %c0_23 = arith.constant 0 : index
    %17 = vector.load %arg2[%c0_20, %c1_21, %c1_22, %c0_23] : memref<1x9x9x16xf32, #tpu.memory_space<vmem>>, vector<1x8x8x4xf32>
    %18 = vector.shape_cast %17 : vector<1x8x8x4xf32> to vector<8x8x4xf32>
    %19 = vector.shape_cast %18 : vector<8x8x4xf32> to vector<64x4xf32>
    %c0_24 = arith.constant 0 : index
    %c32 = arith.constant 32 : index
    %20 = vector.load %arg6[%c0_24, %c32] : memref<64x36xf32, #tpu.memory_space<vmem>>, vector<64x4xf32>
    tpu.vector_store %arg6[%c0_24, %c32], %19 {strides = array<i32>} : memref<64x36xf32, #tpu.memory_space<vmem>>, vector<64x4xf32>,
    %c0_25 = arith.constant 0 : index
    %c0_26 = arith.constant 0 : index
    %21 = vector.load %arg6[%c0_25, %c0_26] : memref<64x36xf32, #tpu.memory_space<vmem>>, vector<64x36xf32>
    %c0_27 = arith.constant 0 : index
    %c0_28 = arith.constant 0 : index
    %22 = vector.load %arg3[%c0_27, %c0_28] : memref<36x128xf32, #tpu.memory_space<vmem>>, vector<36x128xf32>
    %cst = arith.constant dense<0.000000e+00> : vector<64x128xf32>
    %23 = tpu.matmul %21, %22, %cst {dimension_numbers = #tpu.dot_dimension_numbers<[1], [0], [0], [1], [0, 0, 1, 1], [], []>} : vector<64x36xf32>, vector<36x128xf32>, vector<64x128xf32> -> vector<64x128xf32>
    %24 = vector.broadcast %0 : vector<1x128xf32> to vector<64x128xf32>
    %25 = arith.addf %23, %24 : vector<64x128xf32>
    %26 = vector.shape_cast %25 : vector<64x128xf32> to vector<8x8x128xf32>
    %c0_29 = arith.constant 0 : index
    %c0_30 = arith.constant 0 : index
    %c0_31 = arith.constant 0 : index
    %c0_32 = arith.constant 0 : index
    %27 = vector.load %arg5[%c0_29, %c0_30, %c0_31, %c0_32] : memref<1x8x8x128xf32, #tpu.memory_space<vmem>>, vector<1x8x8x128xf32>
    %28 = vector.shape_cast %27 : vector<1x8x8x128xf32> to vector<8x8x128xf32>
    %29 = vector.shape_cast %26 : vector<8x8x128xf32> to vector<1x8x8x128xf32>
    tpu.vector_store %arg5[%c0_29, %c0_30, %c0_31, %c0_32], %29 {strides = array<i32>} : memref<1x8x8x128xf32, #tpu.memory_space<vmem>>, vector<1x8x8x128xf32>,
    return
  }
  func.func @transform_0(%arg0: i32, %arg1: i32) -> (i32, i32, i32, i32) {
    %c0_i32 = arith.constant 0 : i32
    %c0_i32_0 = arith.constant 0 : i32
    %c0_i32_1 = arith.constant 0 : i32
    %c0_i32_2 = arith.constant 0 : i32
    return %arg0, %c0_i32, %c0_i32_0, %c0_i32_1 : i32, i32, i32, i32
  }
  func.func @transform_1(%arg0: i32, %arg1: i32) -> (i32, i32) {
    %c0_i32 = arith.constant 0 : i32
    %c0_i32_0 = arith.constant 0 : i32
    return %c0_i32, %arg1 : i32, i32
  }
  func.func @transform_2(%arg0: i32, %arg1: i32) -> (i32, i32) {
    %c0_i32 = arith.constant 0 : i32
    %c0_i32_0 = arith.constant 0 : i32
    return %c0_i32, %arg1 : i32, i32
  }
  func.func @transform_3(%arg0: i32, %arg1: i32) -> (i32, i32, i32, i32) {
    %c0_i32 = arith.constant 0 : i32
    %c0_i32_0 = arith.constant 0 : i32
    %c0_i32_1 = arith.constant 0 : i32
    return %arg0, %c0_i32, %c0_i32_0, %arg1 : i32, i32, i32, i32
  }
}

</mosaic_0001>

<llo_original>
// kernel: downsample_forward_nhwc.1
$region0: #{downsample_forward_nhwc.1}
  #allocation0 [shape = 'u32[]', space=smem, size = 0x4, offset = 0x4, fixed_abs, tag = 'smem constant byte address 0x4 - core index']
  #allocation1 [shape = 'u32[144,128]{1,0:T(1,128)}', space=vmem, size = 0x12000, scoped, tag = 'internal scratch']
  #allocation2 [shape = 'f32[64,36]{1,0:T(8,128)}', space=vmem, size = 0x8000, scoped, tag = 'scratch operand']
  %s0 = inlined_call_operand.vmem [shape: f32[2,9,9,16], index: 0, kind: input, shape index: {}]
  %s1 = inlined_call_operand.vmem [shape: f32[36,128], index: 1, kind: input, shape index: {}]
  %s2 = inlined_call_operand.vmem [shape: f32[1,128], index: 2, kind: input, shape index: {}]
  %s3 = inlined_call_operand.vmem [shape: f32[2,8,8,128], index: 3, kind: output, shape index: {}]
  %s4 = sld [smem:[#allocation0]]
  $region45: #{downsample_forward_nhwc.1} parent=0
    _
  %s6 = ssub.s32 1, %s4
  %s7 = scalar_select 0, %s6, %s4
  loop: start=0, step=1, limit=4
  $region2: #{downsample_forward_nhwc.1} parent=0 // loop_pre_header
    _
  $region3: #{downsample_forward_nhwc.1} parent=0 // loop_header
    %s9 = sphi 0, %s13
    %p10 = scmp.ge.s32.totalorder %s9, 4
    %s16 = sphi 0, %s28
    %s17 = sphi 0, %s24
    %s18 = sphi 0, %s16
    %s19 = sphi 0, %s17
    %s20 = sphi 0, %s18
    %s21 = sphi 0, %s19
    %s31 = sphi 0, %s33
    %s34 = sphi 0, %s31
    %s35 = sphi 0, %s34
    %s51 = sphi 0, %s35
    %s57 = sphi 0, %s59
    %s60 = sphi 0, %s57
    %s61 = sphi 0, %s60
    %s77 = sphi 0, %s61
    %s83 = sphi 0, %s85
    %s86 = sphi 0, %s83
    %s87 = sphi 0, %s86
    %s103 = sphi 0, %s87
    %s111 = sphi 0, %s113
    %s114 = sphi 0, %s111
    %s115 = sphi 0, %s114
    %s131 = sphi 0, %s115
  $region4: #{downsample_forward_nhwc.1} parent=0 // loop_header_branch
    %12 = sbr.rel (%p10) target = $region8
  $region5: #{downsample_forward_nhwc.1} parent=0 // loop_body
    %s14 = ssub.s32 %s9, 1
    %s15 = ssub.s32 %s9, 2
    %s22 = sadd.s32 1, %s17
    %p23 = scmp.ge.s32.totalorder %s22, 1
    %s24 = scalar_select %p23, 0, %s22
    %s25 = sadd.s32 1, %s16
    %s26 = scalar_select %p23, %s25, %s16
    %p27 = scmp.ge.s32.totalorder %s26, 2
    %s28 = scalar_select %p27, 0, %s26
    %s29 = ssub.s32 %s16, %s28
    %p30 = scmp.eq.s32.totalorder %s29, 0
    %s32 = sadd.s32 %s31, 1
    %s33 = scalar_select %p30, %s31, %s32
    %p36 = pneg %p30
    %p37 = scmp.eq.s32.totalorder %s9, 1
    %p38 = por %p36, %p37
    %p39 = scmp.ne.s32.totalorder %s31, %s34
    %p40 = scmp.eq.s32.totalorder %s9, 0
    %p41 = por %p39, %p40
    %p42 = scmp.ne.s32.totalorder %s31, %s34
    %p43 = scmp.eq.s32.totalorder %s14, 1
    %p44 = por %p42, %p43
    %p45 = scmp.ne.s32.totalorder %s34, %s35
    %p46 = scmp.eq.s32.totalorder %s14, 0
    %p47 = por %p45, %p46
    %p48 = scmp.ne.s32.totalorder %s34, %s35
    %p49 = scmp.eq.s32.totalorder %s15, 1
    %p50 = por %p48, %p49
    %p52 = scmp.ne.s32.totalorder %s35, %s51
    %p53 = scmp.eq.s32.totalorder %s15, 0
    %p54 = por %p52, %p53
    %s55 = ssub.s32 %s17, %s24
    %p56 = scmp.eq.s32.totalorder %s55, 0
    %s58 = sadd.s32 %s57, 1
    %s59 = scalar_select %p56, %s57, %s58
    %p62 = pneg %p56
    %p63 = scmp.eq.s32.totalorder %s9, 1
    %p64 = por %p62, %p63
    %p65 = scmp.ne.s32.totalorder %s57, %s60
    %p66 = scmp.eq.s32.totalorder %s9, 0
    %p67 = por %p65, %p66
    %p68 = scmp.ne.s32.totalorder %s57, %s60
    %p69 = scmp.eq.s32.totalorder %s14, 1
    %p70 = por %p68, %p69
    %p71 = scmp.ne.s32.totalorder %s60, %s61
    %p72 = scmp.eq.s32.totalorder %s14, 0
    %p73 = por %p71, %p72
    %p74 = scmp.ne.s32.totalorder %s60, %s61
    %p75 = scmp.eq.s32.totalorder %s15, 1
    %p76 = por %p74, %p75
    %p78 = scmp.ne.s32.totalorder %s61, %s77
    %p79 = scmp.eq.s32.totalorder %s15, 0
    %p80 = por %p78, %p79
    %s81 = ssub.s32 %s17, %s24
    %p82 = scmp.eq.s32.totalorder %s81, 0
    %s84 = sadd.s32 %s83, 1
    %s85 = scalar_select %p82, %s83, %s84
    %p88 = pneg %p82
    %p89 = scmp.eq.s32.totalorder %s9, 1
    %p90 = por %p88, %p89
    %p91 = scmp.ne.s32.totalorder %s83, %s86
    %p92 = scmp.eq.s32.totalorder %s9, 0
    %p93 = por %p91, %p92
    %p94 = scmp.ne.s32.totalorder %s83, %s86
    %p95 = scmp.eq.s32.totalorder %s14, 1
    %p96 = por %p94, %p95
    %p97 = scmp.ne.s32.totalorder %s86, %s87
    %p98 = scmp.eq.s32.totalorder %s14, 0
    %p99 = por %p97, %p98
    %p100 = scmp.ne.s32.totalorder %s86, %s87
    %p101 = scmp.eq.s32.totalorder %s15, 1
    %p102 = por %p100, %p101
    %p104 = scmp.ne.s32.totalorder %s87, %s103
    %p105 = scmp.eq.s32.totalorder %s15, 0
    %p106 = por %p104, %p105
    %s107 = ssub.s32 %s16, %s28
    %s108 = ssub.s32 %s17, %s24
    %s109 = sor.u32 %s107, %s108
    %p110 = scmp.eq.s32.totalorder %s109, 0
    %s112 = sadd.s32 %s111, 1
    %s113 = scalar_select %p110, %s111, %s112
    %p116 = pneg %p110
    %p117 = scmp.eq.s32.totalorder %s9, 1
    %p118 = por %p116, %p117
    %p119 = scmp.ne.s32.totalorder %s111, %s114
    %p120 = scmp.eq.s32.totalorder %s9, 0
    %p121 = por %p119, %p120
    %p122 = scmp.ne.s32.totalorder %s111, %s114
    %p123 = scmp.eq.s32.totalorder %s14, 1
    %p124 = por %p122, %p123
    %p125 = scmp.ne.s32.totalorder %s114, %s115
    %p126 = scmp.eq.s32.totalorder %s14, 0
    %p127 = por %p125, %p126
    %p128 = scmp.ne.s32.totalorder %s114, %s115
    %p129 = scmp.eq.s32.totalorder %s15, 1
    %p130 = por %p128, %p129
    %p132 = scmp.ne.s32.totalorder %s115, %s131
    %p133 = scmp.eq.s32.totalorder %s15, 0
    %p134 = por %p132, %p133
    %p135 = scmp.le.s32.totalorder 1, %s9
    %p136 = scmp.lt.s32.totalorder %s9, 3
    %p137 = pnand %p135, %p136
    %p138 = pneg %p137
    // Predicated region
    $region9: #{downsample_forward_nhwc.1} parent=5 // pred_check
      _
    $region10: #{downsample_forward_nhwc.1} parent=5 // pred_check_branch
      %140 = sbr.rel (%p137) target = $region12
    $region11: #{downsample_forward_nhwc.1} parent=5 // pred_region
      %s141 = ssub.s32 %s9, 1
      // Predicated region
      $region13: #{downsample_forward_nhwc.1} parent=11 // pred_check
        %p142 = pneg %p73
      $region14: #{downsample_forward_nhwc.1} parent=11 // pred_check_branch
        %144 = sbr.rel (%p142) target = $region16
      $region15: #{downsample_forward_nhwc.1} parent=11 // pred_region
        %p145 = scmp.lt.s32.totalorder %s19, 0
        %s146 = scalar_select %p145, %s19, 0
        %s147 = smul.addr %s146, 8
        %s148 = scalar_lea.vmem %s1, %s147
      $region16: #{downsample_forward_nhwc.1} parent=11 // pred_fallthru
        _
      // Predicated region
      $region17: #{downsample_forward_nhwc.1} parent=11 // pred_check
        %p149 = pneg %p99
      $region18: #{downsample_forward_nhwc.1} parent=11 // pred_check_branch
        %151 = sbr.rel (%p149) target = $region20
      $region19: #{downsample_forward_nhwc.1} parent=11 // pred_region
        %p152 = scmp.lt.s32.totalorder %s19, 0
        %s153 = scalar_select %p152, %s19, 0
        %s154 = scalar_lea.vmem %s2, %s153
      $region20: #{downsample_forward_nhwc.1} parent=11 // pred_fallthru
        _
    $region12: #{downsample_forward_nhwc.1} parent=5 // pred_fallthru
      _
    %p155 = scmp.lt.s32.totalorder %s9, 2
    // Predicated region
    $region21: #{downsample_forward_nhwc.1} parent=5 // pred_check
      %p156 = pneg %p155
    $region22: #{downsample_forward_nhwc.1} parent=5 // pred_check_branch
      %158 = sbr.rel (%p156) target = $region24
    $region23: #{downsample_forward_nhwc.1} parent=5 // pred_region
      // Predicated region
      $region25: #{downsample_forward_nhwc.1} parent=23 // pred_check
        %p159 = pneg %p41
      $region26: #{downsample_forward_nhwc.1} parent=23 // pred_check_branch
        %161 = sbr.rel (%p159) target = $region28
      $region27: #{downsample_forward_nhwc.1} parent=23 // pred_region
        %p162 = scmp.lt.s32.totalorder %s16, 1
        %s163 = scalar_select %p162, %s16, 1
        %s164 = smul.addr %s163, 18
        %s165 = smul.addr %s164, 8
        %s166 = scalar_lea.vmem %s0, %s165
      $region28: #{downsample_forward_nhwc.1} parent=23 // pred_fallthru
        _
    $region24: #{downsample_forward_nhwc.1} parent=5 // pred_fallthru
      _
    %p167 = scmp.le.s32.totalorder 1, %s9
    %p168 = scmp.lt.s32.totalorder %s9, 3
    %p169 = pnand %p167, %p168
    %p170 = pneg %p169
    // Predicated region
    $region29: #{downsample_forward_nhwc.1} parent=5 // pred_check
      _
    $region30: #{downsample_forward_nhwc.1} parent=5 // pred_check_branch
      %172 = sbr.rel (%p169) target = $region32
    $region31: #{downsample_forward_nhwc.1} parent=5 // pred_region
      %s173 = ssub.s32 %s9, 1
      %p174 = scmp.lt.s32.totalorder %s18, 1
      %s175 = scalar_select %p174, %s18, 1
      %s176 = smul.addr %s175, 18
      %s177 = smul.addr %s176, 8
      %s178 = scalar_lea.vmem %s0, %s177
      %p179 = pneg %p47
      %p180 = pneg %p44
      %p181 = scmp.lt.s32.totalorder %s19, 0
      %s182 = scalar_select %p181, %s19, 0
      %s183 = smul.addr %s182, 8
      %s184 = scalar_lea.vmem %s1, %s183
      %p185 = pneg %p73
      %p186 = pneg %p70
      %p187 = scmp.lt.s32.totalorder %s19, 0
      %s188 = scalar_select %p187, %s19, 0
      %s189 = scalar_lea.vmem %s2, %s188
      %p190 = pneg %p99
      %p191 = pneg %p96
      %p192 = pneg %p127
      %p193 = pneg %p124
      %p194 = scmp.lt.s32.totalorder %s18, 1
      %s195 = scalar_select %p194, %s18, 1
      %p196 = scmp.lt.s32.totalorder %s19, 0
      %s197 = scalar_select %p196, %s19, 0
      %s198 = smul.addr %s195, 8
      %s199 = sadd.s32 %s197, %s198
      %s200 = smul.addr %s199, 8
      %s201 = scalar_lea.vmem %s3, %s200
      %p202 = scmp.lt.s32.totalorder %s18, 1
      %s203 = scalar_select %p202, %s18, 1
      %s204 = smul.addr %s203, 18
      %s205 = smul.addr %s204, 8
      %s206 = scalar_lea.vmem %s0, %s205
      %p207 = scmp.lt.s32.totalorder %s19, 0
      %s208 = scalar_select %p207, %s19, 0
      %s209 = smul.addr %s208, 8
      %s210 = scalar_lea.vmem %s1, %s209
      %p211 = scmp.lt.s32.totalorder %s19, 0
      %s212 = scalar_select %p211, %s19, 0
      %s213 = scalar_lea.vmem %s2, %s212
      %p214 = scmp.lt.s32.totalorder %s18, 1
      %s215 = scalar_select %p214, %s18, 1
      %p216 = scmp.lt.s32.totalorder %s19, 0
      %s217 = scalar_select %p216, %s19, 0
      %s218 = smul.addr %s215, 8
      %s219 = sadd.s32 %s217, %s218
      %s220 = smul.addr %s219, 8
      %s221 = scalar_lea.vmem %s3, %s220
      %v222 = vld [vmem:[%s213] sm:$0x1]
      %v223 = vld [vmem:[%s206] sm:$0xff]
      %v224 = vld [vmem:[%s206 + $0x10] sm:$0xff]
      %v225 = vld [vmem:[%s206 + $0x20] sm:$0xff]
      %v226 = vld [vmem:[%s206 + $0x30] sm:$0xff]
      %v227 = vld [vmem:[%s206 + $0x40] sm:$0xff]
      %v228 = vld [vmem:[%s206 + $0x50] sm:$0xff]
      %v229 = vld [vmem:[%s206 + $0x60] sm:$0xff]
      %v230 = vld [vmem:[%s206 + $0x70] sm:$0xff]
      %vm231 = vcmask 130048
      %232 = vst.msk [vmem:[#allocation2] sm:$0xff] %vm231, %v223
      %233 = vst.msk [vmem:[#allocation2 + $0x8] sm:$0xff] %vm231, %v224
      %234 = vst.msk [vmem:[#allocation2 + $0x10] sm:$0xff] %vm231, %v225
      %235 = vst.msk [vmem:[#allocation2 + $0x18] sm:$0xff] %vm231, %v226
      %236 = vst.msk [vmem:[#allocation2 + $0x20] sm:$0xff] %vm231, %v227
      %237 = vst.msk [vmem:[#allocation2 + $0x28] sm:$0xff] %vm231, %v228
      %238 = vst.msk [vmem:[#allocation2 + $0x30] sm:$0xff] %vm231, %v229
      %239 = vst.msk [vmem:[#allocation2 + $0x38] sm:$0xff] %vm231, %v230
      %s240 = scalar_lea.vmem %s206, 16
      %v241 = vld [vmem:[%s240] sm:$0xff]
      %v242 = vld [vmem:[%s240 + $0x10] sm:$0xff]
      %v243 = vld [vmem:[%s240 + $0x20] sm:$0xff]
      %v244 = vld [vmem:[%s240 + $0x30] sm:$0xff]
      %v245 = vld [vmem:[%s240 + $0x40] sm:$0xff]
      %v246 = vld [vmem:[%s240 + $0x50] sm:$0xff]
      %v247 = vld [vmem:[%s240 + $0x60] sm:$0xff]
      %v248 = vld [vmem:[%s240 + $0x70] sm:$0xff]
      %257 = vrot.lane.b32.xlu0 %v241, 16
      %v258 = vpop.permute.xlu0 %257
      %259 = vrot.lane.b32.xlu0 %v242, 16
      %v260 = vpop.permute.xlu0 %259
      %261 = vrot.lane.b32.xlu0 %v243, 16
      %v262 = vpop.permute.xlu0 %261
      %263 = vrot.lane.b32.xlu0 %v244, 16
      %v264 = vpop.permute.xlu0 %263
      %265 = vrot.lane.b32.xlu0 %v245, 16
      %v266 = vpop.permute.xlu0 %265
      %267 = vrot.lane.b32.xlu0 %v246, 16
      %v268 = vpop.permute.xlu0 %267
      %269 = vrot.lane.b32.xlu0 %v247, 16
      %v270 = vpop.permute.xlu0 %269
      %271 = vrot.lane.b32.xlu0 %v248, 16
      %v272 = vpop.permute.xlu0 %271
      %vm281 = vcmask 195712
      %282 = vst.msk [vmem:[#allocation2] sm:$0xff] %vm281, %v258
      %283 = vst.msk [vmem:[#allocation2 + $0x8] sm:$0xff] %vm281, %v260
      %284 = vst.msk [vmem:[#allocation2 + $0x10] sm:$0xff] %vm281, %v262
      %285 = vst.msk [vmem:[#allocation2 + $0x18] sm:$0xff] %vm281, %v264
      %286 = vst.msk [vmem:[#allocation2 + $0x20] sm:$0xff] %vm281, %v266
      %287 = vst.msk [vmem:[#allocation2 + $0x28] sm:$0xff] %vm281, %v268
      %288 = vst.msk [vmem:[#allocation2 + $0x30] sm:$0xff] %vm281, %v270
      %289 = vst.msk [vmem:[#allocation2 + $0x38] sm:$0xff] %vm281, %v272
      %v290 = vld [vmem:[%s206 + $0x1] sm:$0xff]
      %v291 = vld [vmem:[%s206 + $0x11] sm:$0xff]
      %v292 = vld [vmem:[%s206 + $0x21] sm:$0xff]
      %v293 = vld [vmem:[%s206 + $0x31] sm:$0xff]
      %v294 = vld [vmem:[%s206 + $0x41] sm:$0xff]
      %v295 = vld [vmem:[%s206 + $0x51] sm:$0xff]
      %v296 = vld [vmem:[%s206 + $0x61] sm:$0xff]
      %v297 = vld [vmem:[%s206 + $0x71] sm:$0xff]
      %306 = vrot.lane.b32.xlu0 %v290, 24
      %v307 = vpop.permute.xlu0 %306
      %308 = vrot.lane.b32.xlu0 %v291, 24
      %v309 = vpop.permute.xlu0 %308
      %310 = vrot.lane.b32.xlu0 %v292, 24
      %v311 = vpop.permute.xlu0 %310
      %312 = vrot.lane.b32.xlu0 %v293, 24
      %v313 = vpop.permute.xlu0 %312
      %314 = vrot.lane.b32.xlu0 %v294, 24
      %v315 = vpop.permute.xlu0 %314
      %316 = vrot.lane.b32.xlu0 %v295, 24
      %v317 = vpop.permute.xlu0 %316
      %318 = vrot.lane.b32.xlu0 %v296, 24
      %v319 = vpop.permute.xlu0 %318
      %320 = vrot.lane.b32.xlu0 %v297, 24
      %v321 = vpop.permute.xlu0 %320
      %vm330 = vcmask 228544
      %331 = vst.msk [vmem:[#allocation2] sm:$0xff] %vm330, %v307
      %332 = vst.msk [vmem:[#allocation2 + $0x8] sm:$0xff] %vm330, %v309
      %333 = vst.msk [vmem:[#allocation2 + $0x10] sm:$0xff] %vm330, %v311
      %334 = vst.msk [vmem:[#allocation2 + $0x18] sm:$0xff] %vm330, %v313
      %335 = vst.msk [vmem:[#allocation2 + $0x20] sm:$0xff] %vm330, %v315
      %336 = vst.msk [vmem:[#allocation2 + $0x28] sm:$0xff] %vm330, %v317
      %337 = vst.msk [vmem:[#allocation2 + $0x30] sm:$0xff] %vm330, %v319
      %338 = vst.msk [vmem:[#allocation2 + $0x38] sm:$0xff] %vm330, %v321
      %v339 = vld [vmem:[%s206 + $0x1] sm:$0xff]
      %v340 = vld [vmem:[%s206 + $0x11] sm:$0xff]
      %v341 = vld [vmem:[%s206 + $0x21] sm:$0xff]
      %v342 = vld [vmem:[%s206 + $0x31] sm:$0xff]
      %v343 = vld [vmem:[%s206 + $0x41] sm:$0xff]
      %v344 = vld [vmem:[%s206 + $0x51] sm:$0xff]
      %v345 = vld [vmem:[%s206 + $0x61] sm:$0xff]
      %v346 = vld [vmem:[%s206 + $0x71] sm:$0xff]
      %355 = vrot.lane.b32.xlu0 %v339, 20
      %v356 = vpop.permute.xlu0 %355
      %357 = vrot.lane.b32.xlu0 %v340, 20
      %v358 = vpop.permute.xlu0 %357
      %359 = vrot.lane.b32.xlu0 %v341, 20
      %v360 = vpop.permute.xlu0 %359
      %361 = vrot.lane.b32.xlu0 %v342, 20
      %v362 = vpop.permute.xlu0 %361
      %363 = vrot.lane.b32.xlu0 %v343, 20
      %v364 = vpop.permute.xlu0 %363
      %365 = vrot.lane.b32.xlu0 %v344, 20
      %v366 = vpop.permute.xlu0 %365
      %367 = vrot.lane.b32.xlu0 %v345, 20
      %v368 = vpop.permute.xlu0 %367
      %369 = vrot.lane.b32.xlu0 %v346, 20
      %v370 = vpop.permute.xlu0 %369
      %vm379 = vcmask 261344
      %380 = vst.msk [vmem:[#allocation2] sm:$0xff] %vm379, %v356
      %381 = vst.msk [vmem:[#allocation2 + $0x8] sm:$0xff] %vm379, %v358
      %382 = vst.msk [vmem:[#allocation2 + $0x10] sm:$0xff] %vm379, %v360
      %383 = vst.msk [vmem:[#allocation2 + $0x18] sm:$0xff] %vm379, %v362
      %384 = vst.msk [vmem:[#allocation2 + $0x20] sm:$0xff] %vm379, %v364
      %385 = vst.msk [vmem:[#allocation2 + $0x28] sm:$0xff] %vm379, %v366
      %386 = vst.msk [vmem:[#allocation2 + $0x30] sm:$0xff] %vm379, %v368
      %387 = vst.msk [vmem:[#allocation2 + $0x38] sm:$0xff] %vm379, %v370
      %v388 = vld [vmem:[%s240 + $0x1] sm:$0xff]
      %v389 = vld [vmem:[%s240 + $0x11] sm:$0xff]
      %v390 = vld [vmem:[%s240 + $0x21] sm:$0xff]
      %v391 = vld [vmem:[%s240 + $0x31] sm:$0xff]
      %v392 = vld [vmem:[%s240 + $0x41] sm:$0xff]
      %v393 = vld [vmem:[%s240 + $0x51] sm:$0xff]
      %v394 = vld [vmem:[%s240 + $0x61] sm:$0xff]
      %v395 = vld [vmem:[%s240 + $0x71] sm:$0xff]
      %404 = vrot.lane.b32.xlu0 %v388, 32
      %v405 = vpop.permute.xlu0 %404
      %406 = vrot.lane.b32.xlu0 %v389, 32
      %v407 = vpop.permute.xlu0 %406
      %408 = vrot.lane.b32.xlu0 %v390, 32
      %v409 = vpop.permute.xlu0 %408
      %410 = vrot.lane.b32.xlu0 %v391, 32
      %v411 = vpop.permute.xlu0 %410
      %412 = vrot.lane.b32.xlu0 %v392, 32
      %v413 = vpop.permute.xlu0 %412
      %414 = vrot.lane.b32.xlu0 %v393, 32
      %v415 = vpop.permute.xlu0 %414
      %416 = vrot.lane.b32.xlu0 %v394, 32
      %v417 = vpop.permute.xlu0 %416
      %418 = vrot.lane.b32.xlu0 %v395, 32
      %v419 = vpop.permute.xlu0 %418
      %vm428 = vcmask 294144
      %429 = vst.msk [vmem:[#allocation2] sm:$0xff] %vm428, %v405
      %430 = vst.msk [vmem:[#allocation2 + $0x8] sm:$0xff] %vm428, %v407
      %431 = vst.msk [vmem:[#allocation2 + $0x10] sm:$0xff] %vm428, %v409
      %432 = vst.msk [vmem:[#allocation2 + $0x18] sm:$0xff] %vm428, %v411
      %433 = vst.msk [vmem:[#allocation2 + $0x20] sm:$0xff] %vm428, %v413
      %434 = vst.msk [vmem:[#allocation2 + $0x28] sm:$0xff] %vm428, %v415
      %435 = vst.msk [vmem:[#allocation2 + $0x30] sm:$0xff] %vm428, %v417
      %436 = vst.msk [vmem:[#allocation2 + $0x38] sm:$0xff] %vm428, %v419
      %v437 = vld [vmem:[#allocation2] sm:$0xff]
      %v438 = vld [vmem:[#allocation2 + $0x8] sm:$0xff]
      %v439 = vld [vmem:[#allocation2 + $0x10] sm:$0xff]
      %v440 = vld [vmem:[#allocation2 + $0x18] sm:$0xff]
      %v441 = vld [vmem:[#allocation2 + $0x20] sm:$0xff]
      %v442 = vld [vmem:[#allocation2 + $0x28] sm:$0xff]
      %v443 = vld [vmem:[#allocation2 + $0x30] sm:$0xff]
      %v444 = vld [vmem:[#allocation2 + $0x38] sm:$0xff]
      %v445 = vld [vmem:[%s210] sm:$0xff]
      %v446 = vld [vmem:[%s210 + $0x8] sm:$0xff]
      %v447 = vld [vmem:[%s210 + $0x10] sm:$0xff]
      %v448 = vld [vmem:[%s210 + $0x18] sm:$0xff]
      %v449 = vld [vmem:[%s210 + $0x20] sm:$0xf]
      %v451 = vlaneseq
      %v452 = vshrl.u32 %v451, 7
      %v453 = vsub.s32 0, %v452
      %v454 = vrot.slane %v222, %v453
      %vm456 = vcmask 293888
      %v458 = vsel %vm456, %v437, 0
      %v461 = vsel %vm456, %v438, 0
      %v464 = vsel %vm456, %v439, 0
      %v467 = vsel %vm456, %v440, 0
      %v470 = vsel %vm456, %v441, 0
      %v473 = vsel %vm456, %v442, 0
      %v476 = vsel %vm456, %v443, 0
      %v479 = vsel %vm456, %v444, 0
      %vm481 = vcmask 1043456
      %v483 = vsel %vm481, %v449, 0
      %485 = vmatprep.subr.mxu0 0.0
      %486 = vmatpush1.msra.mxu0 %v445
      %487 = vmatprep.subr.mxu0 0.0
      %488 = vmatpush1.msra.mxu0 %v446
      %489 = vmatprep.subr.mxu0 0.0
      %490 = vmatpush1.msra.mxu0 %v447
      %491 = vmatprep.subr.mxu0 0.0
      %492 = vmatpush1.msra.mxu0 %v448
      %493 = vmatprep.subr.mxu0 0.0
      %494 = vmatpush1.msra.mxu0 %v483
      %495 = vmatprep.subr.mxu0 0.0
      %496 = vmatpush1.msra.mxu0 0.0
      %497 = vmatprep.subr.mxu0 0.0
      %498 = vmatpush1.msra.mxu0 0.0
      %499 = vmatprep.subr.mxu0 0.0
      %500 = vmatpush1.msra.mxu0 0.0
      %501 = vmatprep.subr.mxu0 0.0
      %502 = vmatpush1.msra.mxu0 0.0
      %503 = vmatprep.subr.mxu0 0.0
      %504 = vmatpush1.msra.mxu0 0.0
      %505 = vmatprep.subr.mxu0 0.0
      %506 = vmatpush1.msra.mxu0 0.0
      %507 = vmatprep.subr.mxu0 0.0
      %508 = vmatpush1.msra.mxu0 0.0
      %509 = vmatprep.subr.mxu0 0.0
      %510 = vmatpush1.msra.mxu0 0.0
      %511 = vmatprep.subr.mxu0 0.0
      %512 = vmatpush1.msra.mxu0 0.0
      %513 = vmatprep.subr.mxu0 0.0
      %514 = vmatpush1.msra.mxu0 0.0
      %515 = vmatprep.subr.mxu0 0.0
      %516 = vmatpush1.msra.mxu0 0.0
      %517 = vmatprep.subr.mxu0 0.0
      %518 = vmatpush1.msra.mxu0 0.0
      %519 = vmatprep.subr.mxu0 0.0
      %520 = vmatpush1.msra.mxu0 0.0
      %521 = vmatprep.subr.mxu0 0.0
      %522 = vmatpush1.msra.mxu0 0.0
      %523 = vmatprep.subr.mxu0 0.0
      %524 = vmatpush1.msra.mxu0 0.0
      %525 = vmatprep.subr.mxu0 0.0
      %526 = vmatpush1.msra.mxu0 0.0
      %527 = vmatprep.subr.mxu0 0.0
      %528 = vmatpush1.msra.mxu0 0.0
      %529 = vmatprep.subr.mxu0 0.0
      %530 = vmatpush1.msra.mxu0 0.0
      %531 = vmatprep.subr.mxu0 0.0
      %532 = vmatpush1.msra.mxu0 0.0
      %533 = vmatprep.subr.mxu0 0.0
      %534 = vmatpush1.msra.mxu0 0.0
      %535 = vmatprep.subr.mxu0 0.0
      %536 = vmatpush1.msra.mxu0 0.0
      %537 = vmatprep.subr.mxu0 0.0
      %538 = vmatpush1.msra.mxu0 0.0
      %539 = vmatprep.subr.mxu0 0.0
      %540 = vmatpush1.msra.mxu0 0.0
      %541 = vmatprep.subr.mxu0 0.0
      %542 = vmatpush1.msra.mxu0 0.0
      %543 = vmatprep.subr.mxu0 0.0
      %544 = vmatpush1.msra.mxu0 0.0
      %545 = vmatprep.subr.mxu0 0.0
      %546 = vmatpush1.msra.mxu0 0.0
      %547 = vmatprep.subr.mxu0 0.0
      %548 = vmatpush1.msra.mxu0 0.0
      %549 = vmatprep.mubr.f32.mxu0 0.0
      %550 = vmatmul.mubr.f32.gmra.mrb[0].mxu0 %v458
      %v551 = vpop.f32.mrb[0].mxu0
      %v552 = vadd.f32 %v454, %v551
      %v553 = vpop.f32.mrb[0].mxu0
      %554 = vmatprep.mubr.f32.mxu0 0.0
      %555 = vmatmul.mubr.f32.gmra.mrb[0].mxu0 %v461
      %v556 = vpop.f32.mrb[0].mxu0
      %v557 = vadd.f32 %v454, %v556
      %v558 = vpop.f32.mrb[0].mxu0
      %559 = vmatprep.mubr.f32.mxu0 0.0
      %560 = vmatmul.mubr.f32.gmra.mrb[0].mxu0 %v464
      %v561 = vpop.f32.mrb[0].mxu0
      %v562 = vadd.f32 %v454, %v561
      %v563 = vpop.f32.mrb[0].mxu0
      %564 = vmatprep.mubr.f32.mxu0 0.0
      %565 = vmatmul.mubr.f32.gmra.mrb[0].mxu0 %v467
      %v566 = vpop.f32.mrb[0].mxu0
      %v567 = vadd.f32 %v454, %v566
      %v568 = vpop.f32.mrb[0].mxu0
      %569 = vmatprep.mubr.f32.mxu0 0.0
      %570 = vmatmul.mubr.f32.gmra.mrb[0].mxu0 %v470
      %v571 = vpop.f32.mrb[0].mxu0
      %v572 = vadd.f32 %v454, %v571
      %v573 = vpop.f32.mrb[0].mxu0
      %574 = vmatprep.mubr.f32.mxu0 0.0
      %575 = vmatmul.mubr.f32.gmra.mrb[0].mxu0 %v473
      %v576 = vpop.f32.mrb[0].mxu0
      %v577 = vadd.f32 %v454, %v576
      %v578 = vpop.f32.mrb[0].mxu0
      %579 = vmatprep.mubr.f32.mxu0 0.0
      %580 = vmatmul.mubr.f32.gmra.mrb[0].mxu0 %v476
      %v581 = vpop.f32.mrb[0].mxu0
      %v582 = vadd.f32 %v454, %v581
      %v583 = vpop.f32.mrb[0].mxu0
      %584 = vmatprep.mubr.f32.mxu0 0.0
      %585 = vmatmul.mubr.f32.gmra.mrb[0].mxu0 %v479
      %v586 = vpop.f32.mrb[0].mxu0
      %v587 = vadd.f32 %v454, %v586
      %v588 = vpop.f32.mrb[0].mxu0
      %589 = vdwg.mxu0
      %590 = vst [vmem:[%s221] sm:$0xff] %v552
      %591 = vst [vmem:[%s221 + $0x8] sm:$0xff] %v557
      %592 = vst [vmem:[%s221 + $0x10] sm:$0xff] %v562
      %593 = vst [vmem:[%s221 + $0x18] sm:$0xff] %v567
      %594 = vst [vmem:[%s221 + $0x20] sm:$0xff] %v572
      %595 = vst [vmem:[%s221 + $0x28] sm:$0xff] %v577
      %596 = vst [vmem:[%s221 + $0x30] sm:$0xff] %v582
      %597 = vst [vmem:[%s221 + $0x38] sm:$0xff] %v587
      %p598 = scmp.lt.s32.totalorder %s18, 1
      %s599 = scalar_select %p598, %s18, 1
      %p600 = scmp.lt.s32.totalorder %s19, 0
      %s601 = scalar_select %p600, %s19, 0
      %s602 = smul.addr %s599, 8
      %s603 = sadd.s32 %s601, %s602
      %s604 = smul.addr %s603, 8
      %s605 = scalar_lea.vmem %s3, %s604
      // Predicated region
      $region33: #{downsample_forward_nhwc.1} parent=31 // pred_check
        %p606 = pneg %p124
      $region34: #{downsample_forward_nhwc.1} parent=31 // pred_check_branch
        %608 = sbr.rel (%p606) target = $region36
      $region35: #{downsample_forward_nhwc.1} parent=31 // pred_region
        _
      $region36: #{downsample_forward_nhwc.1} parent=31 // pred_fallthru
        _
    $region32: #{downsample_forward_nhwc.1} parent=5 // pred_fallthru
      _
    %p609 = scmp.le.s32.totalorder 2, %s9
    // Predicated region
    $region37: #{downsample_forward_nhwc.1} parent=5 // pred_check
      %p610 = pneg %p609
    $region38: #{downsample_forward_nhwc.1} parent=5 // pred_check_branch
      %612 = sbr.rel (%p610) target = $region40
    $region39: #{downsample_forward_nhwc.1} parent=5 // pred_region
      %s613 = ssub.s32 %s9, 2
      // Predicated region
      $region41: #{downsample_forward_nhwc.1} parent=39 // pred_check
        %p614 = pneg %p130
      $region42: #{downsample_forward_nhwc.1} parent=39 // pred_check_branch
        %616 = sbr.rel (%p614) target = $region44
      $region43: #{downsample_forward_nhwc.1} parent=39 // pred_region
        %p617 = scmp.lt.s32.totalorder %s20, 1
        %s618 = scalar_select %p617, %s20, 1
        %p619 = scmp.lt.s32.totalorder %s21, 0
        %s620 = scalar_select %p619, %s21, 0
        %s621 = smul.addr %s618, 8
        %s622 = sadd.s32 %s620, %s621
        %s623 = smul.addr %s622, 8
        %s624 = scalar_lea.vmem %s3, %s623
      $region44: #{downsample_forward_nhwc.1} parent=39 // pred_fallthru
        _
    $region40: #{downsample_forward_nhwc.1} parent=5 // pred_fallthru
      _
  $region6: #{downsample_forward_nhwc.1} parent=0 // loop_footer
    %s13 = sadd.s32 1, %s9
  $region7: #{downsample_forward_nhwc.1} parent=0 // loop_footer_branch
    %8 = sbr.rel target = $region3
  $region8: #{downsample_forward_nhwc.1} parent=0 // loop_exit
    _

</llo_original>
